<compile_context>
chip_gen: v6e
topology: v6e:2x2x1
jax: 0.10.0
libtpu: 0.0.40
codegen_flags: <defaults>
</compile_context>

<pallas_src>
import functools

import jax
import jax.numpy as jnp
from jax import lax
from jax.experimental import pallas as pl
from jax.experimental.pallas import tpu as pltpu


def _dmi_kernel(x_ref, o_ref, *, nx, ny, nz, coef, periodic):
    """DMI energy density.

    x_ref : (3, nx, ny*nz)  spin, channel-first, y/z flattened onto the lane axis
    o_ref : (nx, ny*nz)     energy density, same flattened layout
    """
    yz = ny * nz
    per_x, per_y, per_z = periodic
    f32 = jnp.float32

    c0 = x_ref[0].astype(f32)            # (nx, yz)
    c1 = x_ref[1].astype(f32)
    c2 = x_ref[2].astype(f32)

    col = lax.broadcasted_iota(jnp.int32, (nx, yz), 1)   # flattened y*nz + z index

    # out[i] = v[(i - k) mod n]  (jnp.roll semantics); shifts kept non-negative.
    def sub_roll(v, k):
        return pltpu.roll(v, k % nx, axis=0)

    def lane_roll(v, k):
        return pltpu.roll(v, k % yz, axis=1)

    # ---- x-axis neighbors: sublane rotation ---------------------------------
    if per_x:
        x_minus = lambda v: sub_roll(v, 1)
        x_plus = lambda v: sub_roll(v, -1)
    else:
        row = lax.broadcasted_iota(jnp.int32, (nx, yz), 0)
        x_minus = lambda v: jnp.where(row == 0, 0.0, sub_roll(v, 1))
        x_plus = lambda v: jnp.where(row == nx - 1, 0.0, sub_roll(v, -1))

    # ---- y-axis neighbors: lane rotation by nz ------------------------------
    # The flattened-axis wrap of a +-nz roll lands exactly on the periodic y
    # neighbor, so periodic y needs no fix-up.
    if per_y:
        y_minus = lambda v: lane_roll(v, nz)
        y_plus = lambda v: lane_roll(v, -nz)
    else:
        y_minus = lambda v: jnp.where(col < nz, 0.0, lane_roll(v, nz))
        y_plus = lambda v: jnp.where(col >= (ny - 1) * nz, 0.0, lane_roll(v, -nz))

    # ---- z-axis neighbors: lane rotation by 1 -------------------------------
    zcol = col % nz
    if per_z:
        # A +-1 roll of the flattened axis crosses a y row at the z boundary;
        # patch those lanes with the in-row periodic neighbor.
        z_minus = lambda v: jnp.where(zcol == 0,
                                      lane_roll(v, -(nz - 1)), lane_roll(v, 1))
        z_plus = lambda v: jnp.where(zcol == nz - 1,
                                     lane_roll(v, nz - 1), lane_roll(v, -1))
    else:
        z_minus = lambda v: jnp.where(zcol == 0, 0.0, lane_roll(v, 1))
        z_plus = lambda v: jnp.where(zcol == nz - 1, 0.0, lane_roll(v, -1))

    # Central-difference form of  sum_axis D_a * (cross(m, m_minus) - cross(m, m_plus))_a
    # with coef = D * 0.5 / dx folded in.
    e = coef[0] * (c1 * (x_minus(c2) - x_plus(c2)) - c2 * (x_minus(c1) - x_plus(c1)))
    e += coef[1] * (c2 * (y_minus(c0) - y_plus(c0)) - c0 * (y_minus(c2) - y_plus(c2)))
    e += coef[2] * (c0 * (z_minus(c1) - z_plus(c1)) - c1 * (z_minus(c0) - z_plus(c0)))

    o_ref[...] = e.astype(o_ref.dtype)


class DMIPallas:
    """JAX/Pallas port of maglab.microfields.DMI (forward pass)."""

    def __init__(self, shape, dx, D_vector, pbc: str):
        self.dx = float(dx)
        self.shape = tuple(int(s) for s in shape)
        self.pbc = pbc
        self.periodic = ('x' in pbc, 'y' in pbc, 'z' in pbc)
        # init_vector(D_vector, shape) is a constant per-component field; fold
        # it and the 0.5*dx**2 / dx**3 scaling into three scalar coefficients.
        scale = 0.5 / self.dx
        self.coef = tuple(float(d) * scale for d in D_vector)

    def __call__(self, spin, geo, Ms):
        # geo and Ms are accepted for signature parity; the torch forward ignores them.
        del geo, Ms
        nx, ny, nz = self.shape
        yz = ny * nz
        # Lane-dense layout: sublane = nx, lane = ny*nz.  (Contiguous collapse
        # of trailing dims; the inverse reshape on the output is also free.)
        x = spin.reshape(3, nx, yz)

        kernel = functools.partial(_dmi_kernel, nx=nx, ny=ny, nz=nz,
                                   coef=self.coef, periodic=self.periodic)

        # TODO(synk): for production-size grids, replace the single VMEM block
        # with a halo'd BlockSpec grid along nx (dimension_semantics=("parallel",)).
        out = pl.pallas_call(
            kernel,
            out_shape=jax.ShapeDtypeStruct((nx, yz), spin.dtype),
            in_specs=[pl.BlockSpec(memory_space=pltpu.MemorySpace.VMEM)],
            out_specs=pl.BlockSpec(memory_space=pltpu.MemorySpace.VMEM),
        )(x)
        return out.reshape(nx, ny, nz)


def dmi_reference(spin, D_vector, pbc, dx):
    """Pure-JAX replica of the torch forward (pad / roll / cross / crop / scale)."""
    px = 0 if 'x' in pbc else 1
    py = 0 if 'y' in pbc else 1
    pz = 0 if 'z' in pbc else 1
    _, nx, ny, nz = spin.shape
    D = jnp.broadcast_to(jnp.asarray(D_vector, jnp.float32)[:, None, None, None],
                         (3, nx, ny, nz))
    D = jnp.pad(D, ((0, 0), (px, px), (py, py), (pz, pz)))
    x = jnp.pad(spin, ((0, 0), (px, px), (py, py), (pz, pz)))
    cross = lambda a, b: jnp.cross(a, b, axis=0)
    d1 = cross(x, jnp.roll(x, 1, axis=1))[0]
    d2 = -cross(x, jnp.roll(x, -1, axis=1))[0]
    d3 = cross(x, jnp.roll(x, 1, axis=2))[1]
    d4 = -cross(x, jnp.roll(x, -1, axis=2))[1]
    d5 = cross(x, jnp.roll(x, 1, axis=3))[2]
    d6 = -cross(x, jnp.roll(x, -1, axis=3))[2]
    E = D[0] * (d1 + d2) + D[1] * (d3 + d4) + D[2] * (d5 + d6)
    X, Y, Z = E.shape
    E = E[px:X - px, py:Y - py, pz:Z - pz]
    E = 0.5 * dx ** 2 * E
    return E / dx ** 3


if __name__ == "__main__":
    nx, ny, nz = 8, 16, 16
    dx = 0.5
    D_vector = (0.1, -0.2, 0.3)

    key = jax.random.PRNGKey(0)
    spin = jax.random.normal(key, (3, nx, ny, nz), dtype=jnp.float32)
    geo = jnp.ones((nx, ny, nz), jnp.float32)   # unused by the forward pass
    Ms = jnp.ones((nx, ny, nz), jnp.float32)    # unused by the forward pass

    # Primary config matches the original demo (periodic x, open y/z); the
    # extra configs exercise the all-open and all-periodic boundary paths.
    for pbc in ('x', '', 'xyz'):
        dmi = DMIPallas((nx, ny, nz), dx, D_vector, pbc)
        E = jax.block_until_ready(dmi(spin, geo, Ms))
        E_ref = dmi_reference(spin, D_vector, pbc, dx)
        assert E.shape == (nx, ny, nz), (pbc, E.shape)
        assert jnp.allclose(E, E_ref, rtol=1e-5, atol=1e-5), \
            (pbc, float(jnp.max(jnp.abs(E - E_ref))))
    print("KERNEL_OK")
</pallas_src>

<mosaic_0001>
module attributes {stable_mosaic.version = 11 : i64} {
  func.func @_dmi_kernel(%arg0: memref<3x8x256xf32, #tpu.memory_space<vmem>>, %arg1: memref<8x256xf32, #tpu.memory_space<vmem>>) attributes {dimension_semantics = [], scalar_prefetch = 0 : i64, scratch_operands = 0 : i64, tpu.core_type = #tpu.core_type<tc>} {
    %c0 = arith.constant 0 : index
    %c0_0 = arith.constant 0 : index
    %c0_1 = arith.constant 0 : index
    %0 = vector.load %arg0[%c0, %c0_0, %c0_1] : memref<3x8x256xf32, #tpu.memory_space<vmem>>, vector<1x8x256xf32>
    %1 = vector.shape_cast %0 : vector<1x8x256xf32> to vector<8x256xf32>
    %c1 = arith.constant 1 : index
    %c0_2 = arith.constant 0 : index
    %c0_3 = arith.constant 0 : index
    %2 = vector.load %arg0[%c1, %c0_2, %c0_3] : memref<3x8x256xf32, #tpu.memory_space<vmem>>, vector<1x8x256xf32>
    %3 = vector.shape_cast %2 : vector<1x8x256xf32> to vector<8x256xf32>
    %c2 = arith.constant 2 : index
    %c0_4 = arith.constant 0 : index
    %c0_5 = arith.constant 0 : index
    %4 = vector.load %arg0[%c2, %c0_4, %c0_5] : memref<3x8x256xf32, #tpu.memory_space<vmem>>, vector<1x8x256xf32>
    %5 = vector.shape_cast %4 : vector<1x8x256xf32> to vector<8x256xf32>
    %6 = tpu.iota {dimensions = array<i32: 1>} : vector<8x256xi32>
    %c16_i32 = arith.constant 16 : i32
    %c0_i32 = arith.constant 0 : i32
    %7 = arith.cmpi eq, %c16_i32, %c0_i32 : i32
    %c1_i32 = arith.constant 1 : i32
    %8 = arith.select %7, %c1_i32, %c16_i32 : i32
    %9 = vector.broadcast %8 : i32 to vector<8x256xi32>
    %10 = arith.remsi %6, %9 : vector<8x256xi32>
    %c0_i32_6 = arith.constant 0 : i32
    %11 = vector.broadcast %c0_i32_6 : i32 to vector<8x256xi32>
    %12 = arith.cmpi ne, %10, %11 : vector<8x256xi32>
    %c0_i32_7 = arith.constant 0 : i32
    %13 = vector.broadcast %c0_i32_7 : i32 to vector<8x256xi32>
    %14 = arith.cmpi slt, %10, %13 : vector<8x256xi32>
    %c0_i32_8 = arith.constant 0 : i32
    %15 = arith.cmpi slt, %8, %c0_i32_8 : i32
    %16 = vector.broadcast %15 : i1 to vector<8x256xi1>
    %17 = vector.broadcast %16 : vector<8x256xi1> to vector<8x256xi1>
    %18 = arith.xori %14, %17 : vector<8x256xi1>
    %19 = arith.andi %18, %12 : vector<8x256xi1>
    %20 = vector.broadcast %8 : i32 to vector<8x256xi32>
    %21 = arith.addi %10, %20 : vector<8x256xi32>
    %22 = arith.select %19, %21, %10 : vector<8x256xi1>, vector<8x256xi32>
    %c1_i32_9 = arith.constant 1 : i32
    %23 = tpu.dynamic_rotate %5 by %c1_i32_9 dim 0 : vector<8x256xf32>, i32 -> vector<8x256xf32>
    %c7_i32 = arith.constant 7 : i32
    %24 = tpu.dynamic_rotate %5 by %c7_i32 dim 0 : vector<8x256xf32>, i32 -> vector<8x256xf32>
    %25 = arith.subf %23, %24 : vector<8x256xf32>
    %26 = arith.mulf %3, %25 : vector<8x256xf32>
    %c1_i32_10 = arith.constant 1 : i32
    %27 = tpu.dynamic_rotate %3 by %c1_i32_10 dim 0 : vector<8x256xf32>, i32 -> vector<8x256xf32>
    %c7_i32_11 = arith.constant 7 : i32
    %28 = tpu.dynamic_rotate %3 by %c7_i32_11 dim 0 : vector<8x256xf32>, i32 -> vector<8x256xf32>
    %29 = arith.subf %27, %28 : vector<8x256xf32>
    %30 = arith.mulf %5, %29 : vector<8x256xf32>
    %31 = arith.subf %26, %30 : vector<8x256xf32>
    %cst = arith.constant 1.000000e-01 : f32
    %32 = vector.broadcast %cst : f32 to vector<8x256xf32>
    %33 = arith.mulf %32, %31 : vector<8x256xf32>
    %c16_i32_12 = arith.constant 16 : i32
    %34 = vector.broadcast %c16_i32_12 : i32 to vector<8x256xi32>
    %35 = arith.cmpi slt, %6, %34 : vector<8x256xi32>
    %c16_i32_13 = arith.constant 16 : i32
    %36 = tpu.dynamic_rotate %1 by %c16_i32_13 dim 1 : vector<8x256xf32>, i32 -> vector<8x256xf32>
    %cst_14 = arith.constant 0.000000e+00 : f32
    %37 = vector.broadcast %cst_14 : f32 to vector<8x256xf32>
    %38 = arith.select %35, %37, %36 : vector<8x256xi1>, vector<8x256xf32>
    %c240_i32 = arith.constant 240 : i32
    %39 = vector.broadcast %c240_i32 : i32 to vector<8x256xi32>
    %40 = arith.cmpi sge, %6, %39 : vector<8x256xi32>
    %c240_i32_15 = arith.constant 240 : i32
    %41 = tpu.dynamic_rotate %1 by %c240_i32_15 dim 1 : vector<8x256xf32>, i32 -> vector<8x256xf32>
    %cst_16 = arith.constant 0.000000e+00 : f32
    %42 = vector.broadcast %cst_16 : f32 to vector<8x256xf32>
    %43 = arith.select %40, %42, %41 : vector<8x256xi1>, vector<8x256xf32>
    %44 = arith.subf %38, %43 : vector<8x256xf32>
    %45 = arith.mulf %5, %44 : vector<8x256xf32>
    %c16_i32_17 = arith.constant 16 : i32
    %46 = vector.broadcast %c16_i32_17 : i32 to vector<8x256xi32>
    %47 = arith.cmpi slt, %6, %46 : vector<8x256xi32>
    %c16_i32_18 = arith.constant 16 : i32
    %48 = tpu.dynamic_rotate %5 by %c16_i32_18 dim 1 : vector<8x256xf32>, i32 -> vector<8x256xf32>
    %cst_19 = arith.constant 0.000000e+00 : f32
    %49 = vector.broadcast %cst_19 : f32 to vector<8x256xf32>
    %50 = arith.select %47, %49, %48 : vector<8x256xi1>, vector<8x256xf32>
    %c240_i32_20 = arith.constant 240 : i32
    %51 = vector.broadcast %c240_i32_20 : i32 to vector<8x256xi32>
    %52 = arith.cmpi sge, %6, %51 : vector<8x256xi32>
    %c240_i32_21 = arith.constant 240 : i32
    %53 = tpu.dynamic_rotate %5 by %c240_i32_21 dim 1 : vector<8x256xf32>, i32 -> vector<8x256xf32>
    %cst_22 = arith.constant 0.000000e+00 : f32
    %54 = vector.broadcast %cst_22 : f32 to vector<8x256xf32>
    %55 = arith.select %52, %54, %53 : vector<8x256xi1>, vector<8x256xf32>
    %56 = arith.subf %50, %55 : vector<8x256xf32>
    %57 = arith.mulf %1, %56 : vector<8x256xf32>
    %58 = arith.subf %45, %57 : vector<8x256xf32>
    %cst_23 = arith.constant -2.000000e-01 : f32
    %59 = vector.broadcast %cst_23 : f32 to vector<8x256xf32>
    %60 = arith.mulf %59, %58 : vector<8x256xf32>
    %61 = arith.addf %33, %60 : vector<8x256xf32>
    %c0_i32_24 = arith.constant 0 : i32
    %62 = vector.broadcast %c0_i32_24 : i32 to vector<8x256xi32>
    %63 = arith.cmpi eq, %22, %62 : vector<8x256xi32>
    %c1_i32_25 = arith.constant 1 : i32
    %64 = tpu.dynamic_rotate %3 by %c1_i32_25 dim 1 : vector<8x256xf32>, i32 -> vector<8x256xf32>
    %cst_26 = arith.constant 0.000000e+00 : f32
    %65 = vector.broadcast %cst_26 : f32 to vector<8x256xf32>
    %66 = arith.select %63, %65, %64 : vector<8x256xi1>, vector<8x256xf32>
    %c15_i32 = arith.constant 15 : i32
    %67 = vector.broadcast %c15_i32 : i32 to vector<8x256xi32>
    %68 = arith.cmpi eq, %22, %67 : vector<8x256xi32>
    %c255_i32 = arith.constant 255 : i32
    %69 = tpu.dynamic_rotate %3 by %c255_i32 dim 1 : vector<8x256xf32>, i32 -> vector<8x256xf32>
    %cst_27 = arith.constant 0.000000e+00 : f32
    %70 = vector.broadcast %cst_27 : f32 to vector<8x256xf32>
    %71 = arith.select %68, %70, %69 : vector<8x256xi1>, vector<8x256xf32>
    %72 = arith.subf %66, %71 : vector<8x256xf32>
    %73 = arith.mulf %1, %72 : vector<8x256xf32>
    %c0_i32_28 = arith.constant 0 : i32
    %74 = vector.broadcast %c0_i32_28 : i32 to vector<8x256xi32>
    %75 = arith.cmpi eq, %22, %74 : vector<8x256xi32>
    %c1_i32_29 = arith.constant 1 : i32
    %76 = tpu.dynamic_rotate %1 by %c1_i32_29 dim 1 : vector<8x256xf32>, i32 -> vector<8x256xf32>
    %cst_30 = arith.constant 0.000000e+00 : f32
    %77 = vector.broadcast %cst_30 : f32 to vector<8x256xf32>
    %78 = arith.select %75, %77, %76 : vector<8x256xi1>, vector<8x256xf32>
    %c15_i32_31 = arith.constant 15 : i32
    %79 = vector.broadcast %c15_i32_31 : i32 to vector<8x256xi32>
    %80 = arith.cmpi eq, %22, %79 : vector<8x256xi32>
    %c255_i32_32 = arith.constant 255 : i32
    %81 = tpu.dynamic_rotate %1 by %c255_i32_32 dim 1 : vector<8x256xf32>, i32 -> vector<8x256xf32>
    %cst_33 = arith.constant 0.000000e+00 : f32
    %82 = vector.broadcast %cst_33 : f32 to vector<8x256xf32>
    %83 = arith.select %80, %82, %81 : vector<8x256xi1>, vector<8x256xf32>
    %84 = arith.subf %78, %83 : vector<8x256xf32>
    %85 = arith.mulf %3, %84 : vector<8x256xf32>
    %86 = arith.subf %73, %85 : vector<8x256xf32>
    %cst_34 = arith.constant 3.000000e-01 : f32
    %87 = vector.broadcast %cst_34 : f32 to vector<8x256xf32>
    %88 = arith.mulf %87, %86 : vector<8x256xf32>
    %89 = arith.addf %61, %88 : vector<8x256xf32>
    %c0_35 = arith.constant 0 : index
    %c0_36 = arith.constant 0 : index
    %90 = vector.load %arg1[%c0_35, %c0_36] : memref<8x256xf32, #tpu.memory_space<vmem>>, vector<8x256xf32>
    tpu.vector_store %arg1[%c0_35, %c0_36], %89 {strides = array<i32>} : memref<8x256xf32, #tpu.memory_space<vmem>>, vector<8x256xf32>,
    return
  }
}

</mosaic_0001>

<llo_original>
// kernel: tpu_custom_call.1
$region0: #{tpu_custom_call.1}
  #allocation0 [shape = 'u32[]', space=smem, size = 0x4, offset = 0x4, fixed_abs, tag = 'smem constant byte address 0x4 - core index']
  #allocation1 [shape = 'u32[144,128]{1,0:T(1,128)}', space=vmem, size = 0x12000, scoped, tag = 'internal scratch']
  %s0 = inlined_call_operand.hbm [shape: f32[3,8,256], index: 0, kind: input, shape index: {}]
  %s1 = inlined_call_operand.hbm [shape: f32[8,256], index: 1, kind: output, shape index: {}]
  %s2 = sld [smem:[#allocation0]]
  $region18: #{tpu_custom_call.1} parent=0
    _
  %s4 = ssub.s32 1, %s2
  %s5 = scalar_select 0, %s4, %s2
  $region1: #{tpu_custom_call.1} parent=0
    #allocation2 [shape = 'u8[24576]{0}', space=vmem, size = 0x6000, scoped, tag = 'input window, operand 0, single buffered']
    #allocation3 [shape = 's32[1]{0}', space=sflag, size = 0x4, scoped, tag = 'scoped memory for tpu_custom_call.1']
    #allocation4 [shape = 's32[1]{0}', space=sflag, size = 0x4, scoped, tag = 'scoped memory for tpu_custom_call.1']
    #allocation5 [shape = 'u8[8192]{0}', space=vmem, size = 0x2000, scoped, tag = 'output window, operand 0, single buffered']
    %6 = vsyncpa [#allocation3], 0
    %7 = vsyncpa [#allocation4], 0
    // Predicated region
    $region2: #{tpu_custom_call.1} parent=1 // pred_check
      _
    $region3: #{tpu_custom_call.1} parent=1 // pred_check_branch
      %9 = sbr.rel (0) target = $region5
    $region4: #{tpu_custom_call.1} parent=1 // pred_region
      %s11 = ssub.s32 768, 768
      %12 = vsyncadd [#allocation3], %s11
      %s13 = sshll.u32 [#allocation2], 4
      %s14 = int_to_ptr.vmem [resolvable:$true] %s13
      %19 = dma.hbm_to_vmem [thread:$0]  %s0, 768, %s14, [#allocation3], 256, 256, 16
    $region5: #{tpu_custom_call.1} parent=1 // pred_fallthru
      _
    // Predicated region
    $region6: #{tpu_custom_call.1} parent=1 // pred_check
      _
    $region7: #{tpu_custom_call.1} parent=1 // pred_check_branch
      %21 = sbr.rel (0) target = $region9
    $region8: #{tpu_custom_call.1} parent=1 // pred_region
      %22 = dma.done [#allocation3], 768
    $region9: #{tpu_custom_call.1} parent=1 // pred_fallthru
      _
    %v23 = vld [vmem:[#allocation2] sm:$0xff]
    %v24 = vld [vmem:[#allocation2 + $0x8] sm:$0xff]
    %s25 = scalar_lea.vmem [#allocation2], 16
    %v26 = vld [vmem:[%s25] sm:$0xff]
    %v27 = vld [vmem:[%s25 + $0x8] sm:$0xff]
    %s28 = scalar_lea.vmem [#allocation2], 32
    %v29 = vld [vmem:[%s28] sm:$0xff]
    %v30 = vld [vmem:[%s28 + $0x8] sm:$0xff]
    %v31 = vlaneseq
    %v32 = vand.u32 %v31, 127
    %v33 = vadd.s32 %v32, 128
    %vm34 = vcmp.lt.s32.totalorder %v32, 0
    %v35 = vsub.s32 0, %v32
    %v36 = vsel %vm34, %v35, %v32
    %v37 = vshrl.u32 %v36, 4
    %v38 = vand.u32 %v36, 15
    %v39 = vsub.s32 0, %v38
    %v40 = vsel %vm34, %v39, %v38
    %vm41 = vcmp.lt.s32.totalorder %v33, 0
    %v42 = vsub.s32 0, %v33
    %v43 = vsel %vm41, %v42, %v33
    %v44 = vshrl.u32 %v43, 4
    %v45 = vand.u32 %v43, 15
    %v46 = vsub.s32 0, %v45
    %v47 = vsel %vm41, %v46, %v45
    %vm48 = vcmp.ne.s32.totalorder %v40, 0
    %vm49 = vcmp.ne.s32.totalorder %v47, 0
    %vm50 = vcmp.lt.s32.totalorder %v40, 0
    %vm51 = vcmp.lt.s32.totalorder %v47, 0
    %vm52 = vmand %vm50, %vm48
    %vm53 = vmand %vm51, %vm49
    %v54 = vadd.s32 %v40, 16
    %v55 = vadd.s32 %v47, 16
    %v56 = vsel %vm52, %v54, %v40
    %v57 = vsel %vm53, %v55, %v47
    %v58 = vrot.slane %v29, 7
    %v59 = vrot.slane %v30, 7
    %v60 = vrot.slane %v29, 1
    %v61 = vrot.slane %v30, 1
    %v62 = vsub.f32 %v58, %v60
    %v63 = vsub.f32 %v59, %v61
    %v64 = vmul.f32 %v26, %v62
    %v65 = vmul.f32 %v27, %v63
    %v66 = vrot.slane %v26, 7
    %v67 = vrot.slane %v27, 7
    %v68 = vrot.slane %v26, 1
    %v69 = vrot.slane %v27, 1
    %v70 = vsub.f32 %v66, %v68
    %v71 = vsub.f32 %v67, %v69
    %v72 = vmul.f32 %v29, %v70
    %v73 = vmul.f32 %v30, %v71
    %v74 = vsub.f32 %v64, %v72
    %v75 = vsub.f32 %v65, %v73
    %v76 = vmul.f32 %v74, 0.1
    %v77 = vmul.f32 %v75, 0.1
    %vm78 = vcmp.lt.s32.totalorder %v32, 16
    %vm79 = vcmp.lt.s32.totalorder %v33, 16
    %80 = vrot.lane.b32.xlu0 %v23, 16
    %v81 = vpop.permute.xlu0 %80
    %82 = vrot.lane.b32.xlu0 %v24, 16
    %v83 = vpop.permute.xlu0 %82
    %v84 = vsel %vm78, %v81, %v83
    %v85 = vsel %vm78, %v83, %v81
    %v86 = vsel %vm78, 0.0, %v85
    %v87 = vsel %vm79, 0.0, %v84
    %vm88 = vcmp.ge.s32.totalorder %v32, 240
    %vm89 = vcmp.ge.s32.totalorder %v33, 240
    %90 = vrot.lane.b32.xlu0 %v23, 112
    %v91 = vpop.permute.xlu0 %90
    %92 = vrot.lane.b32.xlu0 %v24, 112
    %v93 = vpop.permute.xlu0 %92
    %vm94 = vcmp.lt.s32.totalorder %v32, 112
    %v95 = vsel %vm94, %v91, %v93
    %v96 = vsel %vm94, %v93, %v91
    %v97 = vsel %vm88, 0.0, %v95
    %v98 = vsel %vm89, 0.0, %v96
    %v99 = vsub.f32 %v86, %v97
    %v100 = vsub.f32 %v87, %v98
    %v101 = vmul.f32 %v29, %v99
    %v102 = vmul.f32 %v30, %v100
    %103 = vrot.lane.b32.xlu0 %v29, 16
    %v104 = vpop.permute.xlu0 %103
    %105 = vrot.lane.b32.xlu0 %v30, 16
    %v106 = vpop.permute.xlu0 %105
    %v107 = vsel %vm78, %v104, %v106
    %v108 = vsel %vm78, %v106, %v104
    %v109 = vsel %vm78, 0.0, %v108
    %v110 = vsel %vm79, 0.0, %v107
    %111 = vrot.lane.b32.xlu0 %v29, 112
    %v112 = vpop.permute.xlu0 %111
    %113 = vrot.lane.b32.xlu0 %v30, 112
    %v114 = vpop.permute.xlu0 %113
    %v115 = vsel %vm94, %v112, %v114
    %v116 = vsel %vm94, %v114, %v112
    %v117 = vsel %vm88, 0.0, %v115
    %v118 = vsel %vm89, 0.0, %v116
    %v119 = vsub.f32 %v109, %v117
    %v120 = vsub.f32 %v110, %v118
    %v121 = vmul.f32 %v23, %v119
    %v122 = vmul.f32 %v24, %v120
    %v123 = vsub.f32 %v101, %v121
    %v124 = vsub.f32 %v102, %v122
    %v125 = vmul.f32 %v123, -0.2
    %v126 = vmul.f32 %v124, -0.2
    %v127 = vadd.f32 %v76, %v125
    %v128 = vadd.f32 %v77, %v126
    %vm129 = vcmp.eq.s32.totalorder %v56, 0
    %vm130 = vcmp.eq.s32.totalorder %v57, 0
    %131 = vrot.lane.b32.xlu0 %v26, 1
    %v132 = vpop.permute.xlu0 %131
    %133 = vrot.lane.b32.xlu0 %v27, 1
    %v134 = vpop.permute.xlu0 %133
    %vm135 = vcmp.lt.s32.totalorder %v32, 1
    %v136 = vsel %vm135, %v132, %v134
    %v137 = vsel %vm135, %v134, %v132
    %v138 = vsel %vm129, 0.0, %v137
    %v139 = vsel %vm130, 0.0, %v136
    %vm140 = vcmp.eq.s32.totalorder %v56, 15
    %vm141 = vcmp.eq.s32.totalorder %v57, 15
    %142 = vrot.lane.b32.xlu0 %v26, 127
    %v143 = vpop.permute.xlu0 %142
    %144 = vrot.lane.b32.xlu0 %v27, 127
    %v145 = vpop.permute.xlu0 %144
    %vm146 = vcmp.lt.s32.totalorder %v32, 127
    %v147 = vsel %vm146, %v143, %v145
    %v148 = vsel %vm146, %v145, %v143
    %v149 = vsel %vm140, 0.0, %v147
    %v150 = vsel %vm141, 0.0, %v148
    %v151 = vsub.f32 %v138, %v149
    %v152 = vsub.f32 %v139, %v150
    %v153 = vmul.f32 %v23, %v151
    %v154 = vmul.f32 %v24, %v152
    %155 = vrot.lane.b32.xlu0 %v23, 1
    %v156 = vpop.permute.xlu0 %155
    %157 = vrot.lane.b32.xlu0 %v24, 1
    %v158 = vpop.permute.xlu0 %157
    %v159 = vsel %vm135, %v156, %v158
    %v160 = vsel %vm135, %v158, %v156
    %v161 = vsel %vm129, 0.0, %v160
    %v162 = vsel %vm130, 0.0, %v159
    %163 = vrot.lane.b32.xlu0 %v23, 127
    %v164 = vpop.permute.xlu0 %163
    %165 = vrot.lane.b32.xlu0 %v24, 127
    %v166 = vpop.permute.xlu0 %165
    %v167 = vsel %vm146, %v164, %v166
    %v168 = vsel %vm146, %v166, %v164
    %v169 = vsel %vm140, 0.0, %v167
    %v170 = vsel %vm141, 0.0, %v168
    %v171 = vsub.f32 %v161, %v169
    %v172 = vsub.f32 %v162, %v170
    %v173 = vmul.f32 %v26, %v171
    %v174 = vmul.f32 %v27, %v172
    %v175 = vsub.f32 %v153, %v173
    %v176 = vsub.f32 %v154, %v174
    %v177 = vmul.f32 %v175, 0.3
    %v178 = vmul.f32 %v176, 0.3
    %v179 = vadd.f32 %v127, %v177
    %v180 = vadd.f32 %v128, %v178
    %181 = vst [vmem:[#allocation5] sm:$0xff] %v179
    %182 = vst [vmem:[#allocation5 + $0x8] sm:$0xff] %v180
    // Predicated region
    $region10: #{tpu_custom_call.1} parent=1 // pred_check
      _
    $region11: #{tpu_custom_call.1} parent=1 // pred_check_branch
      %184 = sbr.rel (0) target = $region13
    $region12: #{tpu_custom_call.1} parent=1 // pred_region
      %s186 = ssub.s32 256, 256
      %187 = vsyncadd [#allocation4], %s186
      %s189 = sshll.u32 [#allocation5], 4
      %s190 = int_to_ptr.vmem [resolvable:$true] %s189
      %192 = dma.vmem_to_hbm [thread:$0]  %s190, 256, %s1, [#allocation4]
    $region13: #{tpu_custom_call.1} parent=1 // pred_fallthru
      _
    // Predicated region
    $region14: #{tpu_custom_call.1} parent=1 // pred_check
      _
    $region15: #{tpu_custom_call.1} parent=1 // pred_check_branch
      %194 = sbr.rel (0) target = $region17
    $region16: #{tpu_custom_call.1} parent=1 // pred_region
      %195 = dma.done [#allocation4], 256
    $region17: #{tpu_custom_call.1} parent=1 // pred_fallthru
      _
    %196 = vsyncpa [#allocation3], 1
    %197 = vsyncpa [#allocation4], 1

</llo_original>
